<compile_context>
chip_gen: v5e
topology: v5e:2x2
jax: 0.10.0
libtpu: 0.0.40
codegen_flags: <defaults>
</compile_context>

<pallas_src>
import math

import jax
import jax.numpy as jnp
from jax.experimental import pallas as pl
from jax.experimental.pallas import tpu as pltpu


def _round_up(x, m):
    return (x + m - 1) // m * m


def _rows_per_step(n):
    # Sublane-aligned chunk size; bigger chunks amortize per-grid-step overhead.
    for r in (256, 128, 64, 32, 16, 8):
        if n >= r:
            return r
    return 8


def _gather_kernel(ids_ref, table_ref, out_ref):
    """Gather R table rows per grid step.

    ids_ref   : SMEM scalar-prefetch ref with all (padded) flat row ids
    table_ref : full embedding table, VMEM-resident (rows, es_pad)
    out_ref   : (R, es_pad) output block for this grid step
    """
    r = out_ref.shape[0]                      # static (block shape)
    max_row = table_ref.shape[0] - 1
    base = pl.program_id(0) * r

    def copy_row(j):
        row = ids_ref[base + j]
        # torch.nn.Embedding raises on OOB ids; here we clamp defensively.
        row = jnp.clip(row, 0, max_row)
        out_ref[j, :] = table_ref[row, :]

    if r <= 32:
        # Fully static unrolled copies (LLO scheduler visibility).
        for j in range(r):
            copy_row(j)
    else:
        def body(j, carry):
            copy_row(j)
            return carry
        jax.lax.fori_loop(0, r, body, 0)


def embedding_lookup(table: jax.Array, flat_ids: jax.Array) -> jax.Array:
    """Gather rows of `table` (rows, es_pad) at `flat_ids` (N,) -> (N, es_pad)."""
    n = int(flat_ids.shape[0])
    num_rows, es_pad = table.shape
    assert es_pad % 128 == 0 and num_rows % 8 == 0, "table must be lane/sublane padded"

    r = _rows_per_step(n)
    n_pad = _round_up(n, r)
    if n_pad != n:
        flat_ids = jnp.pad(flat_ids, (0, n_pad - n))  # pad with id 0 (valid row)

    itemsize = jnp.dtype(table.dtype).itemsize
    table_bytes = num_rows * es_pad * itemsize
    out_block_bytes = r * es_pad * itemsize
    # Conservative: assume the pipeline double-buffers both operands.
    needed = 2 * table_bytes + 2 * out_block_bytes + (1 << 20)
    # TODO(synk): tables exceeding the VMEM budget (~48 MiB on v7x, ~100 MiB on
    # v5e/v6e) need a chunked HBM gather path (pl.ANY + manual make_async_copy).
    assert needed <= 48 * (1 << 20), "embedding table too large for VMEM-resident gather"
    vmem_limit = int(max(32 * (1 << 20), _round_up(needed, 1 << 20)))

    out = pl.pallas_call(
        _gather_kernel,
        out_shape=jax.ShapeDtypeStruct((n_pad, es_pad), table.dtype),
        grid_spec=pltpu.PrefetchScalarGridSpec(
            num_scalar_prefetch=1,
            grid=(n_pad // r,),
            in_specs=[
                # Whole table as one block: VMEM-resident, constant across grid.
                pl.BlockSpec((num_rows, es_pad), lambda i, ids: (0, 0)),
            ],
            out_specs=pl.BlockSpec((r, es_pad), lambda i, ids: (i, 0)),
        ),
        compiler_params=pltpu.CompilerParams(
            dimension_semantics=("parallel",),   # independent blocks; uses both TCs on v7x
            vmem_limit_bytes=vmem_limit,
        ),
    )(flat_ids.astype(jnp.int32), table)
    return out[:n]


class EmbeddingPallas:
    """JAX/Pallas port of the PyTorch `Embedding` module."""

    def __init__(self, dataset, parameter, key):
        self.ent2id = dataset["ent2id"]
        self.rel2id = dataset["rel2id"]
        self.es = parameter["embed_dim"]
        self.num_ent = len(self.ent2id)
        self.num_rel = len(self.rel2id)

        k1, k2 = jax.random.split(key)
        # Deterministic xavier_uniform-style init (In-Train / Discard branch).
        bound_e = math.sqrt(6.0 / (self.num_ent + self.es))
        bound_r = math.sqrt(6.0 / (self.num_rel + self.es))
        self.ent_table = jax.random.uniform(
            k1, (self.num_ent, self.es), jnp.float32, -bound_e, bound_e
        )
        self.rel_table = jax.random.uniform(
            k2, (self.num_rel, self.es), jnp.float32, -bound_r, bound_r
        )
        # TODO(synk): 'Pre-Train' branch would copy dataset['ent2emb'] (numpy)
        # into ent_table; synthetic init is used instead.

        # Fused + padded table: lane dim -> multiple of 128, rows -> multiple
        # of 8.  Relation rows sit at offset num_ent.
        self.es_pad = _round_up(self.es, 128)
        n_rows = self.num_ent + self.num_rel
        n_rows_pad = _round_up(n_rows, 8)
        table = jnp.zeros((n_rows_pad, self.es_pad), jnp.float32)
        table = table.at[: self.num_ent, : self.es].set(self.ent_table)
        table = table.at[self.num_ent:n_rows, : self.es].set(self.rel_table)
        self.table = table

    def forward(self, triples):
        # Same index construction as the PyTorch module (pure Python glue).
        idx = [
            [[self.ent2id[t[0]], self.ent2id[t[2]]] for t in batch]
            for batch in triples
        ]
        idx = jnp.asarray(idx, dtype=jnp.int32)          # (B, few, 2)
        idxR = [[[self.rel2id[batch[0][1]]]] for batch in triples]
        idxR = jnp.asarray(idxR, dtype=jnp.int32)        # (B, 1, 1)

        # One fused gather for entities + relations (relations offset into the
        # combined table) -> a single pallas_call.
        n_ent_ids = idx.size
        flat = jnp.concatenate(
            [idx.reshape(-1), idxR.reshape(-1) + self.num_ent]
        )
        emb = embedding_lookup(self.table, flat)         # (N_total, es_pad)
        emb = emb[:, : self.es]                          # drop lane padding

        ent_emb = emb[:n_ent_ids].reshape(idx.shape + (self.es,))   # (B, few, 2, es)
        rel_emb = emb[n_ent_ids:].reshape(idxR.shape + (self.es,))  # (B, 1, 1, es)
        return [ent_emb, rel_emb]


if __name__ == "__main__":
    # Small synthetic knowledge-graph dataset.
    ent_names = [f"e{i}" for i in range(10)]
    rel_names = [f"r{i}" for i in range(5)]
    dataset = {
        "ent2id": {n: i for i, n in enumerate(ent_names)},
        "rel2id": {n: i for i, n in enumerate(rel_names)},
    }
    parameter = {"embed_dim": 32, "device": None, "data_form": "In-Train"}

    key = jax.random.PRNGKey(0)
    model = EmbeddingPallas(dataset, parameter, key)

    # triples: B=2 batches, few=3 triples each; same relation within a batch
    # (the module only reads batch[0][1] for the relation index).
    triples = [
        [("e0", "r1", "e3"), ("e2", "r1", "e5"), ("e7", "r1", "e1")],
        [("e4", "r3", "e9"), ("e6", "r3", "e8"), ("e0", "r3", "e2")],
    ]

    ent_emb, rel_emb = model.forward(triples)
    ent_emb = jax.block_until_ready(ent_emb)
    rel_emb = jax.block_until_ready(rel_emb)

    # Sanity check against a plain-JAX gather on the unpadded tables.
    idx = jnp.asarray(
        [[[dataset["ent2id"][t[0]], dataset["ent2id"][t[2]]] for t in b] for b in triples],
        dtype=jnp.int32,
    )
    idxR = jnp.asarray(
        [[[dataset["rel2id"][b[0][1]]]] for b in triples], dtype=jnp.int32
    )
    ref_ent = model.ent_table[idx]
    ref_rel = model.rel_table[idxR]
    assert ent_emb.shape == (2, 3, 2, 32) and rel_emb.shape == (2, 1, 1, 32)
    assert jnp.allclose(ent_emb, ref_ent) and jnp.allclose(rel_emb, ref_rel)

    print("KERNEL_OK")
</pallas_src>

<mosaic_0001>
module attributes {stable_mosaic.version = 11 : i64} {
  func.func @_gather_kernel(%arg0: i32, %arg1: memref<16xi32, #tpu.memory_space<smem>>, %arg2: memref<16x128xf32, #tpu.memory_space<vmem>>, %arg3: memref<8x128xf32, #tpu.memory_space<vmem>>) attributes {dimension_semantics = [#tpu.dimension_semantics<parallel>], iteration_bounds = array<i64: 2>, scalar_prefetch = 1 : i64, scratch_operands = 0 : i64, tpu.core_type = #tpu.core_type<tc>, window_params = [{pipeline_mode = #tpu.pipeline_mode<synchronous>, transform_indices = @transform_0, window_bounds = array<i64: 16, 128>}, {transform_indices = @transform_1, window_bounds = array<i64: 8, 128>}]} {
    %c8_i32 = arith.constant 8 : i32
    %0 = arith.muli %arg0, %c8_i32 : i32
    %c0_i32 = arith.constant 0 : i32
    %1 = arith.addi %0, %c0_i32 : i32
    %2 = arith.index_cast %1 : i32 to index
    %3 = memref.load %arg1[%2] : memref<16xi32, #tpu.memory_space<smem>>
    %c0_i32_0 = arith.constant 0 : i32
    %c15_i32 = arith.constant 15 : i32
    %4 = arith.maxsi %c0_i32_0, %3 : i32
    %5 = arith.minsi %c15_i32, %4 : i32
    %6 = arith.index_cast %5 : i32 to index
    %c0 = arith.constant 0 : index
    %7 = vector.load %arg2[%6, %c0] : memref<16x128xf32, #tpu.memory_space<vmem>>, vector<1x128xf32>
    %8 = vector.shape_cast %7 : vector<1x128xf32> to vector<128xf32>
    %c0_1 = arith.constant 0 : index
    %c0_2 = arith.constant 0 : index
    %9 = vector.load %arg3[%c0_1, %c0_2] : memref<8x128xf32, #tpu.memory_space<vmem>>, vector<1x128xf32>
    %10 = vector.shape_cast %9 : vector<1x128xf32> to vector<128xf32>
    %11 = vector.shape_cast %8 : vector<128xf32> to vector<1x128xf32>
    tpu.vector_store %arg3[%c0_1, %c0_2], %11 {strides = array<i32>} : memref<8x128xf32, #tpu.memory_space<vmem>>, vector<1x128xf32>,
    %c1_i32 = arith.constant 1 : i32
    %12 = arith.addi %0, %c1_i32 : i32
    %13 = arith.index_cast %12 : i32 to index
    %14 = memref.load %arg1[%13] : memref<16xi32, #tpu.memory_space<smem>>
    %c0_i32_3 = arith.constant 0 : i32
    %c15_i32_4 = arith.constant 15 : i32
    %15 = arith.maxsi %c0_i32_3, %14 : i32
    %16 = arith.minsi %c15_i32_4, %15 : i32
    %17 = arith.index_cast %16 : i32 to index
    %c0_5 = arith.constant 0 : index
    %18 = vector.load %arg2[%17, %c0_5] : memref<16x128xf32, #tpu.memory_space<vmem>>, vector<1x128xf32>
    %19 = vector.shape_cast %18 : vector<1x128xf32> to vector<128xf32>
    %c1 = arith.constant 1 : index
    %c0_6 = arith.constant 0 : index
    %20 = vector.load %arg3[%c1, %c0_6] : memref<8x128xf32, #tpu.memory_space<vmem>>, vector<1x128xf32>
    %21 = vector.shape_cast %20 : vector<1x128xf32> to vector<128xf32>
    %22 = vector.shape_cast %19 : vector<128xf32> to vector<1x128xf32>
    tpu.vector_store %arg3[%c1, %c0_6], %22 {strides = array<i32>} : memref<8x128xf32, #tpu.memory_space<vmem>>, vector<1x128xf32>,
    %c2_i32 = arith.constant 2 : i32
    %23 = arith.addi %0, %c2_i32 : i32
    %24 = arith.index_cast %23 : i32 to index
    %25 = memref.load %arg1[%24] : memref<16xi32, #tpu.memory_space<smem>>
    %c0_i32_7 = arith.constant 0 : i32
    %c15_i32_8 = arith.constant 15 : i32
    %26 = arith.maxsi %c0_i32_7, %25 : i32
    %27 = arith.minsi %c15_i32_8, %26 : i32
    %28 = arith.index_cast %27 : i32 to index
    %c0_9 = arith.constant 0 : index
    %29 = vector.load %arg2[%28, %c0_9] : memref<16x128xf32, #tpu.memory_space<vmem>>, vector<1x128xf32>
    %30 = vector.shape_cast %29 : vector<1x128xf32> to vector<128xf32>
    %c2 = arith.constant 2 : index
    %c0_10 = arith.constant 0 : index
    %31 = vector.load %arg3[%c2, %c0_10] : memref<8x128xf32, #tpu.memory_space<vmem>>, vector<1x128xf32>
    %32 = vector.shape_cast %31 : vector<1x128xf32> to vector<128xf32>
    %33 = vector.shape_cast %30 : vector<128xf32> to vector<1x128xf32>
    tpu.vector_store %arg3[%c2, %c0_10], %33 {strides = array<i32>} : memref<8x128xf32, #tpu.memory_space<vmem>>, vector<1x128xf32>,
    %c3_i32 = arith.constant 3 : i32
    %34 = arith.addi %0, %c3_i32 : i32
    %35 = arith.index_cast %34 : i32 to index
    %36 = memref.load %arg1[%35] : memref<16xi32, #tpu.memory_space<smem>>
    %c0_i32_11 = arith.constant 0 : i32
    %c15_i32_12 = arith.constant 15 : i32
    %37 = arith.maxsi %c0_i32_11, %36 : i32
    %38 = arith.minsi %c15_i32_12, %37 : i32
    %39 = arith.index_cast %38 : i32 to index
    %c0_13 = arith.constant 0 : index
    %40 = vector.load %arg2[%39, %c0_13] : memref<16x128xf32, #tpu.memory_space<vmem>>, vector<1x128xf32>
    %41 = vector.shape_cast %40 : vector<1x128xf32> to vector<128xf32>
    %c3 = arith.constant 3 : index
    %c0_14 = arith.constant 0 : index
    %42 = vector.load %arg3[%c3, %c0_14] : memref<8x128xf32, #tpu.memory_space<vmem>>, vector<1x128xf32>
    %43 = vector.shape_cast %42 : vector<1x128xf32> to vector<128xf32>
    %44 = vector.shape_cast %41 : vector<128xf32> to vector<1x128xf32>
    tpu.vector_store %arg3[%c3, %c0_14], %44 {strides = array<i32>} : memref<8x128xf32, #tpu.memory_space<vmem>>, vector<1x128xf32>,
    %c4_i32 = arith.constant 4 : i32
    %45 = arith.addi %0, %c4_i32 : i32
    %46 = arith.index_cast %45 : i32 to index
    %47 = memref.load %arg1[%46] : memref<16xi32, #tpu.memory_space<smem>>
    %c0_i32_15 = arith.constant 0 : i32
    %c15_i32_16 = arith.constant 15 : i32
    %48 = arith.maxsi %c0_i32_15, %47 : i32
    %49 = arith.minsi %c15_i32_16, %48 : i32
    %50 = arith.index_cast %49 : i32 to index
    %c0_17 = arith.constant 0 : index
    %51 = vector.load %arg2[%50, %c0_17] : memref<16x128xf32, #tpu.memory_space<vmem>>, vector<1x128xf32>
    %52 = vector.shape_cast %51 : vector<1x128xf32> to vector<128xf32>
    %c4 = arith.constant 4 : index
    %c0_18 = arith.constant 0 : index
    %53 = vector.load %arg3[%c4, %c0_18] : memref<8x128xf32, #tpu.memory_space<vmem>>, vector<1x128xf32>
    %54 = vector.shape_cast %53 : vector<1x128xf32> to vector<128xf32>
    %55 = vector.shape_cast %52 : vector<128xf32> to vector<1x128xf32>
    tpu.vector_store %arg3[%c4, %c0_18], %55 {strides = array<i32>} : memref<8x128xf32, #tpu.memory_space<vmem>>, vector<1x128xf32>,
    %c5_i32 = arith.constant 5 : i32
    %56 = arith.addi %0, %c5_i32 : i32
    %57 = arith.index_cast %56 : i32 to index
    %58 = memref.load %arg1[%57] : memref<16xi32, #tpu.memory_space<smem>>
    %c0_i32_19 = arith.constant 0 : i32
    %c15_i32_20 = arith.constant 15 : i32
    %59 = arith.maxsi %c0_i32_19, %58 : i32
    %60 = arith.minsi %c15_i32_20, %59 : i32
    %61 = arith.index_cast %60 : i32 to index
    %c0_21 = arith.constant 0 : index
    %62 = vector.load %arg2[%61, %c0_21] : memref<16x128xf32, #tpu.memory_space<vmem>>, vector<1x128xf32>
    %63 = vector.shape_cast %62 : vector<1x128xf32> to vector<128xf32>
    %c5 = arith.constant 5 : index
    %c0_22 = arith.constant 0 : index
    %64 = vector.load %arg3[%c5, %c0_22] : memref<8x128xf32, #tpu.memory_space<vmem>>, vector<1x128xf32>
    %65 = vector.shape_cast %64 : vector<1x128xf32> to vector<128xf32>
    %66 = vector.shape_cast %63 : vector<128xf32> to vector<1x128xf32>
    tpu.vector_store %arg3[%c5, %c0_22], %66 {strides = array<i32>} : memref<8x128xf32, #tpu.memory_space<vmem>>, vector<1x128xf32>,
    %c6_i32 = arith.constant 6 : i32
    %67 = arith.addi %0, %c6_i32 : i32
    %68 = arith.index_cast %67 : i32 to index
    %69 = memref.load %arg1[%68] : memref<16xi32, #tpu.memory_space<smem>>
    %c0_i32_23 = arith.constant 0 : i32
    %c15_i32_24 = arith.constant 15 : i32
    %70 = arith.maxsi %c0_i32_23, %69 : i32
    %71 = arith.minsi %c15_i32_24, %70 : i32
    %72 = arith.index_cast %71 : i32 to index
    %c0_25 = arith.constant 0 : index
    %73 = vector.load %arg2[%72, %c0_25] : memref<16x128xf32, #tpu.memory_space<vmem>>, vector<1x128xf32>
    %74 = vector.shape_cast %73 : vector<1x128xf32> to vector<128xf32>
    %c6 = arith.constant 6 : index
    %c0_26 = arith.constant 0 : index
    %75 = vector.load %arg3[%c6, %c0_26] : memref<8x128xf32, #tpu.memory_space<vmem>>, vector<1x128xf32>
    %76 = vector.shape_cast %75 : vector<1x128xf32> to vector<128xf32>
    %77 = vector.shape_cast %74 : vector<128xf32> to vector<1x128xf32>
    tpu.vector_store %arg3[%c6, %c0_26], %77 {strides = array<i32>} : memref<8x128xf32, #tpu.memory_space<vmem>>, vector<1x128xf32>,
    %c7_i32 = arith.constant 7 : i32
    %78 = arith.addi %0, %c7_i32 : i32
    %79 = arith.index_cast %78 : i32 to index
    %80 = memref.load %arg1[%79] : memref<16xi32, #tpu.memory_space<smem>>
    %c0_i32_27 = arith.constant 0 : i32
    %c15_i32_28 = arith.constant 15 : i32
    %81 = arith.maxsi %c0_i32_27, %80 : i32
    %82 = arith.minsi %c15_i32_28, %81 : i32
    %83 = arith.index_cast %82 : i32 to index
    %c0_29 = arith.constant 0 : index
    %84 = vector.load %arg2[%83, %c0_29] : memref<16x128xf32, #tpu.memory_space<vmem>>, vector<1x128xf32>
    %85 = vector.shape_cast %84 : vector<1x128xf32> to vector<128xf32>
    %c7 = arith.constant 7 : index
    %c0_30 = arith.constant 0 : index
    %86 = vector.load %arg3[%c7, %c0_30] : memref<8x128xf32, #tpu.memory_space<vmem>>, vector<1x128xf32>
    %87 = vector.shape_cast %86 : vector<1x128xf32> to vector<128xf32>
    %88 = vector.shape_cast %85 : vector<128xf32> to vector<1x128xf32>
    tpu.vector_store %arg3[%c7, %c0_30], %88 {strides = array<i32>} : memref<8x128xf32, #tpu.memory_space<vmem>>, vector<1x128xf32>,
    return
  }
  func.func @transform_0(%arg0: i32, %arg1: memref<16xi32, #tpu.memory_space<smem>>) -> (i32, i32) {
    %c0_i32 = arith.constant 0 : i32
    %c0_i32_0 = arith.constant 0 : i32
    %c0_i32_1 = arith.constant 0 : i32
    return %c0_i32, %c0_i32_0 : i32, i32
  }
  func.func @transform_1(%arg0: i32, %arg1: memref<16xi32, #tpu.memory_space<smem>>) -> (i32, i32) {
    %c0_i32 = arith.constant 0 : i32
    %c0_i32_0 = arith.constant 0 : i32
    return %arg0, %c0_i32 : i32, i32
  }
}

</mosaic_0001>

<llo_original>
// kernel: tpu_custom_call.1
$region0: #{tpu_custom_call.1}
  #allocation0 [shape = 'u32[]', space=smem, size = 0x4, offset = 0x4, fixed_abs, tag = 'smem constant byte address 0x4 - core index']
  #allocation1 [shape = 'u32[72,128]{1,0:T(1,128)}', space=vmem, size = 0x9000, scoped, tag = 'internal scratch']
  #allocation2 [shape = 's32[1]{0}', space=sflag, size = 0x4, scoped, tag = 'scoped memory for tpu_custom_call.1']
  #allocation3 [shape = 'u8[512]{0}', space=smem, size = 0x200, scoped, tag = 'prefetched SMEM operand 0']
  %s0 = inlined_call_operand.hbm [shape: s32[16], index: 0, kind: input, shape index: {}]
  %s1 = inlined_call_operand.hbm [shape: f32[16,128], index: 1, kind: input, shape index: {}]
  %s2 = inlined_call_operand.hbm [shape: f32[16,128], index: 2, kind: output, shape index: {}]
  %s3 = sld [smem:[#allocation0]]
  $region41: #{tpu_custom_call.1} parent=0
    _
  %s5 = ssub.s32 1, %s3
  %s6 = scalar_select 0, %s5, %s3
  %s8 = sshll.u32 %s0, 4
  %s9 = int_to_ptr.hbm [resolvable:$true] %s8
  %11 = dma.hbm_to_smem %s9, 16, [#allocation3], [#allocation2]
  %13 = dma.done [#allocation2], 16
  %14 = sfence
  $region1: #{tpu_custom_call.1} parent=0
    #allocation4 [shape = 'u8[8192]{0}', space=vmem, size = 0x2000, scoped, tag = 'input window, operand 1, single buffered']
    #allocation5 [shape = 's32[2]{0}', space=sflag, size = 0x8, scoped, tag = 'scoped memory for tpu_custom_call.1']
    #allocation6 [shape = 's32[2]{0}', space=sflag, size = 0x8, scoped, tag = 'scoped memory for tpu_custom_call.1']
    #allocation7 [shape = 'u8[8192]{0}', space=vmem, size = 0x2000, scoped, tag = 'output window, operand 0']
    %15 = vsyncpa [#allocation5], 0
    %16 = vsyncpa [#allocation6], 0
    %s17 = scalar_lea.sflag [#allocation6], 1
    %18 = vsyncpa %s17, 0
    loop: start=0, step=1, limit=4
    $region2: #{tpu_custom_call.1} parent=1 // loop_pre_header
      _
    $region3: #{tpu_custom_call.1} parent=1 // loop_header
      %s20 = sphi 0, %s24
      %p21 = scmp.ge.s32.totalorder %s20, 4
      %s28 = sphi 0, %s28
      %s30 = sphi 0, %s28
      %s31 = sphi 0, %s30
      %s45 = sphi 0, %s31
      %s51 = sphi 0, %s53
      %s54 = sphi 0, %s51
      %s55 = sphi 0, %s54
      %s71 = sphi 0, %s55
    $region4: #{tpu_custom_call.1} parent=1 // loop_header_branch
      %23 = sbr.rel (%p21) target = $region8
    $region5: #{tpu_custom_call.1} parent=1 // loop_body
      %s25 = ssub.s32 %s20, 1
      %s26 = ssub.s32 %s20, 2
      %s27 = sadd.s32 %s20, 1
      %s29 = sadd.s32 %s28, 1
      %p32 = scmp.eq.s32.totalorder %s20, 1
      %p33 = scmp.ne.s32.totalorder %s28, %s30
      %p34 = scmp.eq.s32.totalorder %s20, 0
      %p35 = por %p33, %p34
      %p36 = scmp.ne.s32.totalorder %s28, %s30
      %p37 = scmp.eq.s32.totalorder %s25, 1
      %p38 = por %p36, %p37
      %p39 = scmp.ne.s32.totalorder %s30, %s31
      %p40 = scmp.eq.s32.totalorder %s25, 0
      %p41 = por %p39, %p40
      %p42 = scmp.ne.s32.totalorder %s30, %s31
      %p43 = scmp.eq.s32.totalorder %s26, 1
      %p44 = por %p42, %p43
      %p46 = scmp.ne.s32.totalorder %s31, %s45
      %p47 = scmp.eq.s32.totalorder %s26, 0
      %p48 = por %p46, %p47
      %s49 = ssub.s32 %s20, %s27
      %p50 = scmp.eq.s32.totalorder %s49, 0
      %s52 = sadd.s32 %s51, 1
      %s53 = scalar_select %p50, %s51, %s52
      %p56 = pneg %p50
      %p57 = scmp.eq.s32.totalorder %s20, 1
      %p58 = por %p56, %p57
      %p59 = scmp.ne.s32.totalorder %s51, %s54
      %p60 = scmp.eq.s32.totalorder %s20, 0
      %p61 = por %p59, %p60
      %p62 = scmp.ne.s32.totalorder %s51, %s54
      %p63 = scmp.eq.s32.totalorder %s25, 1
      %p64 = por %p62, %p63
      %p65 = scmp.ne.s32.totalorder %s54, %s55
      %p66 = scmp.eq.s32.totalorder %s25, 0
      %p67 = por %p65, %p66
      %p68 = scmp.ne.s32.totalorder %s54, %s55
      %p69 = scmp.eq.s32.totalorder %s26, 1
      %p70 = por %p68, %p69
      %p72 = scmp.ne.s32.totalorder %s55, %s71
      %p73 = scmp.eq.s32.totalorder %s26, 0
      %p74 = por %p72, %p73
      %p75 = scmp.le.s32.totalorder 1, %s20
      %p76 = scmp.lt.s32.totalorder %s20, 3
      %p77 = pnand %p75, %p76
      %p78 = pneg %p77
      // Predicated region
      $region9: #{tpu_custom_call.1} parent=5 // pred_check
        _
      $region10: #{tpu_custom_call.1} parent=5 // pred_check_branch
        %80 = sbr.rel (%p77) target = $region12
      $region11: #{tpu_custom_call.1} parent=5 // pred_region
        %s81 = ssub.s32 %s20, 1
        // Predicated region
        $region13: #{tpu_custom_call.1} parent=11 // pred_check
          %p82 = pneg %p41
        $region14: #{tpu_custom_call.1} parent=11 // pred_check_branch
          %84 = sbr.rel (%p82) target = $region16
        $region15: #{tpu_custom_call.1} parent=11 // pred_region
          %86 = vsyncadd [#allocation5], 0
          %s87 = sshll.u32 %s1, 4
          %s88 = int_to_ptr.hbm [resolvable:$true] %s87
          %s89 = sshll.u32 [#allocation4], 4
          %s90 = int_to_ptr.vmem [resolvable:$true] %s89
          %95 = dma.hbm_to_vmem [thread:$0]  %s88, 256, %s90, [#allocation5], 128, 128, 8
        $region16: #{tpu_custom_call.1} parent=11 // pred_fallthru
          _
      $region12: #{tpu_custom_call.1} parent=5 // pred_fallthru
        _
      %p96 = scmp.lt.s32.totalorder %s20, 2
      // Predicated region
      $region17: #{tpu_custom_call.1} parent=5 // pred_check
        %p97 = pneg %p96
      $region18: #{tpu_custom_call.1} parent=5 // pred_check_branch
        %99 = sbr.rel (%p97) target = $region20
      $region19: #{tpu_custom_call.1} parent=5 // pred_region
        _
      $region20: #{tpu_custom_call.1} parent=5 // pred_fallthru
        _
      %p100 = scmp.le.s32.totalorder 1, %s20
      %p101 = scmp.lt.s32.totalorder %s20, 3
      %p102 = pnand %p100, %p101
      %p103 = pneg %p102
      // Predicated region
      $region21: #{tpu_custom_call.1} parent=5 // pred_check
        _
      $region22: #{tpu_custom_call.1} parent=5 // pred_check_branch
        %105 = sbr.rel (%p102) target = $region24
      $region23: #{tpu_custom_call.1} parent=5 // pred_region
        %s106 = ssub.s32 %s20, 1
        // Predicated region
        $region25: #{tpu_custom_call.1} parent=23 // pred_check
          %p107 = pneg %p41
        $region26: #{tpu_custom_call.1} parent=23 // pred_check_branch
          %109 = sbr.rel (%p107) target = $region28
        $region27: #{tpu_custom_call.1} parent=23 // pred_region
          %111 = dma.done [#allocation5], 256
        $region28: #{tpu_custom_call.1} parent=23 // pred_fallthru
          _
        %p112 = pneg %p41
        %p113 = pneg %p38
        %p114 = pneg %p67
        %p115 = pneg %p64
        %s116 = sand.u32 %s54, 1
        %s117 = scalar_lea.sflag [#allocation6], %s116
        %s118 = sand.u32 %s54, 1
        %s119 = smul.addr %s118, 8
        %s120 = scalar_lea.vmem [#allocation7], %s119
        %s121 = smul.u32 %s25, 8
        %s122 = sld [smem:[#allocation3 + %s121]]
        %p123 = scmp.gt.s32.totalorder %s122, 0
        %s124 = scalar_select %p123, %s122, 0
        %p125 = scmp.lt.s32.totalorder %s124, 15
        %s126 = scalar_select %p125, %s124, 15
        %s127 = scalar_lea.vmem [#allocation4], %s126
        %v128 = vld [vmem:[%s127] sm:$0x1]
        %129 = vst [vmem:[%s120] sm:$0x1] %v128
        %s130 = sadd.s32 %s121, 1
        %s131 = sld [smem:[#allocation3 + %s130]]
        %p132 = scmp.gt.s32.totalorder %s131, 0
        %s133 = scalar_select %p132, %s131, 0
        %p134 = scmp.lt.s32.totalorder %s133, 15
        %s135 = scalar_select %p134, %s133, 15
        %s136 = scalar_lea.vmem [#allocation4], %s135
        %v137 = vld [vmem:[%s136] sm:$0x1]
        %138 = vst [vmem:[%s120 + $0x1] sm:$0x1] %v137
        %s139 = sadd.s32 %s121, 2
        %s140 = sld [smem:[#allocation3 + %s139]]
        %p141 = scmp.gt.s32.totalorder %s140, 0
        %s142 = scalar_select %p141, %s140, 0
        %p143 = scmp.lt.s32.totalorder %s142, 15
        %s144 = scalar_select %p143, %s142, 15
        %s145 = scalar_lea.vmem [#allocation4], %s144
        %v146 = vld [vmem:[%s145] sm:$0x1]
        %147 = vst [vmem:[%s120 + $0x2] sm:$0x1] %v146
        %s148 = sadd.s32 %s121, 3
        %s149 = sld [smem:[#allocation3 + %s148]]
        %p150 = scmp.gt.s32.totalorder %s149, 0
        %s151 = scalar_select %p150, %s149, 0
        %p152 = scmp.lt.s32.totalorder %s151, 15
        %s153 = scalar_select %p152, %s151, 15
        %s154 = scalar_lea.vmem [#allocation4], %s153
        %v155 = vld [vmem:[%s154] sm:$0x1]
        %156 = vst [vmem:[%s120 + $0x3] sm:$0x1] %v155
        %s157 = sadd.s32 %s121, 4
        %s158 = sld [smem:[#allocation3 + %s157]]
        %p159 = scmp.gt.s32.totalorder %s158, 0
        %s160 = scalar_select %p159, %s158, 0
        %p161 = scmp.lt.s32.totalorder %s160, 15
        %s162 = scalar_select %p161, %s160, 15
        %s163 = scalar_lea.vmem [#allocation4], %s162
        %v164 = vld [vmem:[%s163] sm:$0x1]
        %165 = vst [vmem:[%s120 + $0x4] sm:$0x1] %v164
        %s166 = sadd.s32 %s121, 5
        %s167 = sld [smem:[#allocation3 + %s166]]
        %p168 = scmp.gt.s32.totalorder %s167, 0
        %s169 = scalar_select %p168, %s167, 0
        %p170 = scmp.lt.s32.totalorder %s169, 15
        %s171 = scalar_select %p170, %s169, 15
        %s172 = scalar_lea.vmem [#allocation4], %s171
        %v173 = vld [vmem:[%s172] sm:$0x1]
        %174 = vst [vmem:[%s120 + $0x5] sm:$0x1] %v173
        %s175 = sadd.s32 %s121, 6
        %s176 = sld [smem:[#allocation3 + %s175]]
        %p177 = scmp.gt.s32.totalorder %s176, 0
        %s178 = scalar_select %p177, %s176, 0
        %p179 = scmp.lt.s32.totalorder %s178, 15
        %s180 = scalar_select %p179, %s178, 15
        %s181 = scalar_lea.vmem [#allocation4], %s180
        %v182 = vld [vmem:[%s181] sm:$0x1]
        %183 = vst [vmem:[%s120 + $0x6] sm:$0x1] %v182
        %s184 = sadd.s32 %s121, 7
        %s185 = sld [smem:[#allocation3 + %s184]]
        %p186 = scmp.gt.s32.totalorder %s185, 0
        %s187 = scalar_select %p186, %s185, 0
        %p188 = scmp.lt.s32.totalorder %s187, 15
        %s189 = scalar_select %p188, %s187, 15
        %s190 = scalar_lea.vmem [#allocation4], %s189
        %v191 = vld [vmem:[%s190] sm:$0x1]
        %192 = vst [vmem:[%s120 + $0x7] sm:$0x1] %v191
        %s193 = sand.u32 %s54, 1
        %s194 = scalar_lea.sflag [#allocation6], %s193
        %s195 = sand.u32 %s54, 1
        %s196 = smul.addr %s195, 8
        %s197 = scalar_lea.vmem [#allocation7], %s196
        // Predicated region
        $region29: #{tpu_custom_call.1} parent=23 // pred_check
          %p198 = pneg %p64
        $region30: #{tpu_custom_call.1} parent=23 // pred_check_branch
          %200 = sbr.rel (%p198) target = $region32
        $region31: #{tpu_custom_call.1} parent=23 // pred_region
          %202 = vsyncadd %s194, 0
          %s203 = smul.addr %s25, 8
          %s204 = scalar_lea.hbm %s2, %s203
          %s206 = sshll.u32 %s197, 4
          %s207 = int_to_ptr.vmem [resolvable:$true] %s206
          %s208 = sshll.u32 %s204, 4
          %s209 = int_to_ptr.hbm [resolvable:$true] %s208
          %211 = dma.vmem_to_hbm [thread:$0]  %s207, 128, %s209, %s194
        $region32: #{tpu_custom_call.1} parent=23 // pred_fallthru
          _
      $region24: #{tpu_custom_call.1} parent=5 // pred_fallthru
        _
      %p212 = scmp.le.s32.totalorder 2, %s20
      // Predicated region
      $region33: #{tpu_custom_call.1} parent=5 // pred_check
        %p213 = pneg %p212
      $region34: #{tpu_custom_call.1} parent=5 // pred_check_branch
        %215 = sbr.rel (%p213) target = $region36
      $region35: #{tpu_custom_call.1} parent=5 // pred_region
        %s216 = ssub.s32 %s20, 2
        // Predicated region
        $region37: #{tpu_custom_call.1} parent=35 // pred_check
          %p217 = pneg %p70
        $region38: #{tpu_custom_call.1} parent=35 // pred_check_branch
          %219 = sbr.rel (%p217) target = $region40
        $region39: #{tpu_custom_call.1} parent=35 // pred_region
          %s220 = sand.u32 %s55, 1
          %s221 = scalar_lea.sflag [#allocation6], %s220
          %s222 = sand.u32 %s55, 1
          %s223 = smul.addr %s222, 8
          %s224 = scalar_lea.vmem [#allocation7], %s223
          %226 = dma.done %s221, 128
        $region40: #{tpu_custom_call.1} parent=35 // pred_fallthru
          _
      $region36: #{tpu_custom_call.1} parent=5 // pred_fallthru
        _
    $region6: #{tpu_custom_call.1} parent=1 // loop_footer
      %s24 = sadd.s32 1, %s20
    $region7: #{tpu_custom_call.1} parent=1 // loop_footer_branch
      %19 = sbr.rel target = $region3
    $region8: #{tpu_custom_call.1} parent=1 // loop_exit
      _
    %227 = vsyncpa [#allocation5], 1
    %s228 = scalar_lea.sflag [#allocation5], 1
    %229 = vsyncpa %s228, 1
    %230 = vsyncpa [#allocation6], 1
    %s231 = scalar_lea.sflag [#allocation6], 1
    %232 = vsyncpa %s231, 1

</llo_original>
